<compile_context>
chip_gen: v7x
topology: tpu7x:2x2x1
jax: 0.10.0
libtpu: 0.0.40
codegen_flags: <defaults>
</compile_context>

<pallas_src>
import jax
import jax.numpy as jnp
from jax.experimental import pallas as pl
from jax.experimental.pallas import tpu as pltpu


def _nll_loss_kernel(pred_ref, target_ref, out_ref):
    # pred_ref  : VMEM (B, C) log-probabilities (native dtype)
    # target_ref: VMEM (B, 1) int32 class indices
    # out_ref   : SMEM (1,)   f32 scalar result
    pred = pred_ref[...].astype(jnp.float32)           # compute in f32 always
    B, C = pred.shape

    col_ids = jax.lax.broadcasted_iota(jnp.int32, (B, C), dimension=1)
    tgt = target_ref[...]                               # (B, 1) int32
    onehot_mask = col_ids == tgt                        # lane-broadcast, O(1) in B

    # Masked select (NOT a one-hot multiply: avoids -inf * 0 = NaN when pred
    # contains -inf log-probs) and one reduction to a scalar.
    picked = jnp.where(onehot_mask, pred, jnp.float32(0.0))
    out_ref[0] = jnp.sum(picked) * jnp.float32(-1.0 / B)   # fused negate + mean


def nll_loss_pallas(pred, target, trans_feat=None):
    """Pallas equivalent of get_loss.forward (trans_feat is accepted, unused)."""
    B, C = pred.shape
    tgt = target.astype(jnp.int32).reshape(B, 1)        # one padded vreg in VMEM
    out = pl.pallas_call(
        _nll_loss_kernel,
        out_shape=jax.ShapeDtypeStruct((1,), jnp.float32),
        in_specs=[
            pl.BlockSpec((B, C), lambda: (0, 0)),        # full pred tile (native dtype)
            pl.BlockSpec((B, 1), lambda: (0, 0)),        # target indices, lane-broadcastable
        ],
        out_specs=pl.BlockSpec(memory_space=pltpu.MemorySpace.SMEM),
    )(pred, tgt)
    return out[0]


if __name__ == "__main__":
    key = jax.random.PRNGKey(0)
    k_logits, k_target, k_trans = jax.random.split(key, 3)

    B, NUM_CLASS = 8, 40   # pointnet2_cls_msg uses 40-class log-probs
    logits = jax.random.normal(k_logits, (B, NUM_CLASS), dtype=jnp.float32)
    pred = jax.nn.log_softmax(logits, axis=-1)                  # log-probabilities
    target = jax.random.randint(k_target, (B,), 0, NUM_CLASS, dtype=jnp.int32)
    trans_feat = jax.random.normal(k_trans, (B, 3, 3), dtype=jnp.float32)  # unused

    loss = jax.block_until_ready(nll_loss_pallas(pred, target, trans_feat))
    ref = -jnp.mean(pred[jnp.arange(B), target])
    assert jnp.allclose(loss, ref, atol=1e-5, rtol=1e-5), (loss, ref)

    # Robustness: -inf log-probs at non-target entries must not poison the mean.
    bad_col = (target[0] + 1) % NUM_CLASS
    pred_inf = pred.at[0, bad_col].set(-jnp.inf)
    loss_inf = jax.block_until_ready(nll_loss_pallas(pred_inf, target, trans_feat))
    ref_inf = -jnp.mean(pred_inf[jnp.arange(B), target])
    assert jnp.isfinite(loss_inf), loss_inf
    assert jnp.allclose(loss_inf, ref_inf, atol=1e-5, rtol=1e-5), (loss_inf, ref_inf)

    # bf16 pred path (native-dtype DMA, f32 compute in-kernel).
    loss_bf16 = jax.block_until_ready(
        nll_loss_pallas(pred.astype(jnp.bfloat16), target, trans_feat))
    ref_bf16 = -jnp.mean(pred.astype(jnp.bfloat16).astype(jnp.float32)[jnp.arange(B), target])
    assert jnp.allclose(loss_bf16, ref_bf16, atol=1e-2, rtol=1e-2), (loss_bf16, ref_bf16)

    print("KERNEL_OK")
</pallas_src>

<mosaic_0001>
module attributes {stable_mosaic.version = 11 : i64} {
  func.func @_nll_loss_kernel(%arg0: memref<8x40xf32, #tpu.memory_space<vmem>>, %arg1: memref<8x1xi32, #tpu.memory_space<vmem>>, %arg2: memref<1xf32, #tpu.memory_space<smem>>) attributes {dimension_semantics = [], scalar_prefetch = 0 : i64, scratch_operands = 0 : i64, tpu.core_type = #tpu.core_type<tc>} {
    %c0 = arith.constant 0 : index
    %c0_0 = arith.constant 0 : index
    %0 = vector.load %arg0[%c0, %c0_0] : memref<8x40xf32, #tpu.memory_space<vmem>>, vector<8x40xf32>
    %1 = tpu.iota {dimensions = array<i32: 1>} : vector<8x40xi32>
    %c0_1 = arith.constant 0 : index
    %c0_2 = arith.constant 0 : index
    %2 = vector.load %arg1[%c0_1, %c0_2] : memref<8x1xi32, #tpu.memory_space<vmem>>, vector<8x1xi32>
    %3 = vector.broadcast %2 : vector<8x1xi32> to vector<8x40xi32>
    %4 = arith.cmpi eq, %1, %3 : vector<8x40xi32>
    %cst = arith.constant 0.000000e+00 : f32
    %5 = vector.broadcast %cst : f32 to vector<8x40xf32>
    %6 = arith.select %4, %0, %5 : vector<8x40xi1>, vector<8x40xf32>
    %7 = vector.shape_cast %6 : vector<8x40xf32> to vector<1x8x40xf32>
    %cst_3 = arith.constant dense<0.000000e+00> : vector<1xf32>
    %8 = vector.multi_reduction <add>, %7, %cst_3 [1, 2] : vector<1x8x40xf32> to vector<1xf32>
    %9 = vector.shape_cast %8 : vector<1xf32> to vector<1x1x1xf32>
    %10 = vector.extract %9[0, 0, 0] : f32 from vector<1x1x1xf32>
    %cst_4 = arith.constant -1.250000e-01 : f32
    %11 = arith.mulf %10, %cst_4 : f32
    %c0_5 = arith.constant 0 : index
    %12 = memref.load %arg2[%c0_5] : memref<1xf32, #tpu.memory_space<smem>>
    memref.store %11, %arg2[%c0_5] : memref<1xf32, #tpu.memory_space<smem>>
    return
  }
}

</mosaic_0001>

<llo_original>
// kernel: tpu_custom_call.1
$region0: #{tpu_custom_call.1}
  #allocation0 [shape = 'u32[]', space=smem, size = 0x4, offset = 0x4, fixed_abs, tag = 'smem constant byte address 0x4 - core index']
  #allocation1 [shape = 'u32[144,128]{1,0:T(1,128)}', space=vmem, size = 0x12000, scoped, tag = 'internal scratch']
  %s0 = inlined_call_operand.vmem [shape: f32[8,40], index: 0, kind: input, shape index: {}]
  %s1 = inlined_call_operand.vmem [shape: s32[8,1], index: 1, kind: input, shape index: {}]
  %s2 = inlined_call_operand.hbm [shape: f32[1], index: 2, kind: output, shape index: {}]
  %s3 = sld [smem:[#allocation0]]
  $region18: #{tpu_custom_call.1} parent=0
    _
  %s5 = ssub.s32 1, %s3
  %s6 = scalar_select 0, %s5, %s3
  $region1: #{tpu_custom_call.1} parent=0
    #allocation2 [shape = 'u8[512]{0}', space=smem, size = 0x200, scoped, tag = 'output window, operand 0, single buffered']
    #allocation3 [shape = 's32[1]{0}', space=sflag, size = 0x4, scoped, tag = 'scoped memory for tpu_custom_call.1']
    %7 = vsyncpa [#allocation3], 0
    // Predicated region
    $region2: #{tpu_custom_call.1} parent=1 // pred_check
      _
    $region3: #{tpu_custom_call.1} parent=1 // pred_check_branch
      %9 = sbr.rel (0) target = $region5
    $region4: #{tpu_custom_call.1} parent=1 // pred_region
      _
    $region5: #{tpu_custom_call.1} parent=1 // pred_fallthru
      _
    // Predicated region
    $region6: #{tpu_custom_call.1} parent=1 // pred_check
      _
    $region7: #{tpu_custom_call.1} parent=1 // pred_check_branch
      %11 = sbr.rel (0) target = $region9
    $region8: #{tpu_custom_call.1} parent=1 // pred_region
      _
    $region9: #{tpu_custom_call.1} parent=1 // pred_fallthru
      _
    %v12 = vld [vmem:[%s0] sm:$0xff]
    %v13 = vlaneseq
    %v14 = vand.u32 %v13, 127
    %v15 = vld [vmem:[%s1] sm:$0xff]
    %16 = vset.pattern.permute.xlu0 0
    %17 = vperm.xlu0 %16, %v15
    %v18 = vpop.permute.xlu0 %17
    %vm19 = vcmp.eq.s32.totalorder %v14, %v18
    %v20 = vsel %vm19, %v12, 0.0
    %vm21 = vcmask 326656
    %v22 = vsel %vm21, %v20, 0.0
    %23 = vadd.xlane.f32.xlu0 %v22
    %v24 = vpop.xlane.xlu0 %23
    %v25 = vrot.slane %v24, 4
    %v26 = vadd.f32 %v24, %v25
    %v27 = vrot.slane %v26, 2
    %v28 = vadd.f32 %v26, %v27
    %v29 = vrot.slane %v28, 1
    %v30 = vadd.f32 %v28, %v29
    %s31 = vtos %v30
    %s32 = smul.f32 %s31, -0.125
    %s33 = scalar_lea.smem [#allocation2], 0
    %34 = sst [smem:[%s33]] %s32
    // Predicated region
    $region10: #{tpu_custom_call.1} parent=1 // pred_check
      _
    $region11: #{tpu_custom_call.1} parent=1 // pred_check_branch
      %36 = sbr.rel (0) target = $region13
    $region12: #{tpu_custom_call.1} parent=1 // pred_region
      %s38 = ssub.s32 16, 16
      %39 = vsyncadd [#allocation3], %s38
      %42 = dma.smem_to_hbm [#allocation2], 16, %s2, [#allocation3]
    $region13: #{tpu_custom_call.1} parent=1 // pred_fallthru
      _
    // Predicated region
    $region14: #{tpu_custom_call.1} parent=1 // pred_check
      _
    $region15: #{tpu_custom_call.1} parent=1 // pred_check_branch
      %44 = sbr.rel (0) target = $region17
    $region16: #{tpu_custom_call.1} parent=1 // pred_region
      %45 = dma.done [#allocation3], 16
    $region17: #{tpu_custom_call.1} parent=1 // pred_fallthru
      _
    %46 = sfence
    %47 = vsyncpa [#allocation3], 1

</llo_original>
